<compile_context>
chip_gen: v7x
topology: tpu7x:2x2x1
jax: 0.10.0
libtpu: 0.0.40
codegen_flags: <defaults>
</compile_context>

<pallas_src>
import functools

import jax
import jax.numpy as jnp
from jax.experimental import pallas as pl
from jax.experimental.pallas import tpu as pltpu


def _round_up(x, m):
    return (x + m - 1) // m * m


def _ce_pred_kernel(logits_ref, labels_ref, preds_ref, part_ref, *,
                    batch, tile_b):
    i = pl.program_id(0)

    x_in = logits_ref[...]                       # (TB, C), native dtype
    labels = labels_ref[...]                     # (TB, 1) int32
    tb, num_classes = x_in.shape

    # --- max / argmax compare path in native dtype -------------------------
    m_in = jnp.max(x_in, axis=-1, keepdims=True)               # (TB, 1)
    is_max = x_in == m_in                                       # (TB, C)
    cls = jax.lax.broadcasted_iota(jnp.int32, (tb, num_classes), 1)

    # --- CrossEntropy via label-select (no logp / one-hot temporaries) -----
    z = x_in.astype(jnp.float32) - m_in.astype(jnp.float32)     # (TB, C)
    lse = jnp.log(jnp.sum(jnp.exp(z), axis=-1, keepdims=True))  # (TB, 1)
    label_z = jnp.sum(jnp.where(cls == labels, z, 0.0),
                      axis=-1, keepdims=True)                   # (TB, 1)
    nll = lse - label_z                                         # (TB, 1)

    # --- predictions = lowest index achieving the row max ------------------
    # (ties resolve to the lowest index, matching jnp.argmax; an all-NaN row
    #  would yield the sentinel `num_classes` — labels are assumed valid.)
    preds = jnp.min(jnp.where(is_max, cls, num_classes),
                    axis=-1, keepdims=True).astype(jnp.int32)   # (TB, 1)
    preds_ref[...] = preds

    correct = (preds == labels).astype(jnp.float32)             # (TB, 1)

    # Ragged batch: mask the out-of-bounds rows of the last block with a
    # NaN/Inf-safe select (those rows hold unspecified data, no pad copy).
    if batch % tile_b != 0:
        row = jax.lax.broadcasted_iota(jnp.int32, (tb, 1), 0) + i * tile_b
        valid = row < batch
        nll = jnp.where(valid, nll, 0.0)
        correct = jnp.where(valid, correct, 0.0)

    # Per-tile partial sums land in an independent output block per grid
    # step (keeps the batch axis megacore-parallel on v7x); final sum + /B
    # happens in the wrapper.  loss partial -> [0,0], correct count -> [0,1].
    loss_sum = jnp.sum(nll)
    corr_sum = jnp.sum(correct)
    r8 = jax.lax.broadcasted_iota(jnp.int32, (8, 128), 0)
    c128 = jax.lax.broadcasted_iota(jnp.int32, (8, 128), 1)
    part = jnp.where((r8 == 0) & (c128 == 0), loss_sum,
                     jnp.where((r8 == 0) & (c128 == 1), corr_sum, 0.0))
    part_ref[0] = part


def model_step(logits, labels):
    """Returns (loss, predictions, accuracy) exactly like the PyTorch module's
    loss() / predictions() / accuracy() helpers applied to given logits."""
    B, C = logits.shape
    in_bytes = logits.dtype.itemsize

    # Batch tile: target a ~4 MiB logits block, bounded by a 40 MiB VMEM
    # budget that accounts for the double-buffered input block plus up to
    # ~6 live f32 (TB, C) temporaries (z, exp(z), masks, iota) and the small
    # per-row columns — safe within v7x's 64 MiB physical VMEM, generous on
    # v5e/v6e's 128 MiB.
    TARGET_BLOCK = 4 << 20
    VMEM_BUDGET = 40 << 20
    per_row = C * (2 * in_bytes + 6 * 4) + 64
    TB = _round_up(max(1, TARGET_BLOCK // max(1, C * in_bytes)), 8)
    while TB > 8 and TB * per_row > VMEM_BUDGET:
        TB = max(8, _round_up(TB // 2, 8))
    TB = min(TB, _round_up(B, 8))
    # TODO(synk): class-axis (vocab-scale C) online-softmax tiling; for very
    # large C even a TB=8 block can exceed the budget.
    n_tiles = (B + TB - 1) // TB

    labels2d = labels.astype(jnp.int32).reshape(B, 1)
    kernel = functools.partial(_ce_pred_kernel, batch=B, tile_b=TB)

    out_shapes = (
        jax.ShapeDtypeStruct((B, 1), jnp.int32),               # predictions
        jax.ShapeDtypeStruct((n_tiles, 8, 128), jnp.float32),  # per-tile partials
    )
    preds, partials = pl.pallas_call(
        kernel,
        out_shape=out_shapes,
        grid=(n_tiles,),
        in_specs=[
            pl.BlockSpec((TB, C), lambda i: (i, 0)),
            pl.BlockSpec((TB, 1), lambda i: (i, 0)),
        ],
        out_specs=(
            pl.BlockSpec((TB, 1), lambda i: (i, 0)),
            pl.BlockSpec((1, 8, 128), lambda i: (i, 0, 0)),
        ),
        compiler_params=pltpu.CompilerParams(
            # Every grid step writes disjoint output blocks -> batch axis is
            # megacore-parallel (both v7x TensorCores stream half the batch).
            dimension_semantics=("parallel",),
            vmem_limit_bytes=48 << 20,
        ),
    )(logits, labels2d)

    inv_b = jnp.float32(1.0 / B)
    loss = jnp.sum(partials[:, 0, 0]) * inv_b
    acc = jnp.sum(partials[:, 0, 1]) * inv_b
    return loss, preds[:, 0], acc


if __name__ == "__main__":
    key = jax.random.PRNGKey(0)
    k_embed, k_logits, k_labels = jax.random.split(key, 3)

    # Deterministic "embedding_matrix" mirroring PyTorchModel.__init__
    # (vocab=32, dim=16).  forward()/logits() are abstract in the module, so
    # the embedding is carried as a parameter only.
    vocab, edim = 32, 16
    embedding_matrix = jax.random.normal(k_embed, (vocab, edim), jnp.float32)
    embed_size = embedding_matrix.shape[0]  # matches embedding_matrix.size()[0]

    B, C = 8, 32  # batch, num classes
    logits = jax.random.normal(k_logits, (B, C), jnp.float32)
    labels = jax.random.randint(k_labels, (B,), 0, C, dtype=jnp.int32)

    loss, preds, acc = model_step(logits, labels)
    jax.block_until_ready((loss, preds, acc))

    # Sanity check against plain-JAX reference of the PyTorch semantics.
    ref_logp = jax.nn.log_softmax(logits, axis=-1)
    ref_loss = -jnp.mean(ref_logp[jnp.arange(B), labels])
    ref_preds = jnp.argmax(logits, axis=-1).astype(jnp.int32)
    ref_acc = jnp.mean((ref_preds == labels).astype(jnp.float32))
    assert jnp.allclose(loss, ref_loss, rtol=1e-5, atol=1e-5), (loss, ref_loss)
    assert jnp.all(preds == ref_preds)
    assert jnp.allclose(acc, ref_acc)

    print("KERNEL_OK")
</pallas_src>

<mosaic_0001>
module attributes {stable_mosaic.version = 11 : i64} {
  func.func @_ce_pred_kernel(%arg0: i32, %arg1: memref<8x32xf32, #tpu.memory_space<vmem>>, %arg2: memref<8x1xi32, #tpu.memory_space<vmem>>, %arg3: memref<8x1xi32, #tpu.memory_space<vmem>>, %arg4: memref<1x8x128xf32, #tpu.memory_space<vmem>>) attributes {dimension_semantics = [#tpu.dimension_semantics<parallel>], iteration_bounds = array<i64: 1>, scalar_prefetch = 0 : i64, scratch_operands = 0 : i64, tpu.core_type = #tpu.core_type<tc>, window_params = [{transform_indices = @transform_0, window_bounds = array<i64: 8, 32>}, {transform_indices = @transform_1, window_bounds = array<i64: 8, 1>}, {transform_indices = @transform_2, window_bounds = array<i64: 8, 1>}, {transform_indices = @transform_3, window_bounds = array<i64: 1, 8, 128>}]} {
    %c0 = arith.constant 0 : index
    %c0_0 = arith.constant 0 : index
    %0 = vector.load %arg1[%c0, %c0_0] : memref<8x32xf32, #tpu.memory_space<vmem>>, vector<8x32xf32>
    %c0_1 = arith.constant 0 : index
    %c0_2 = arith.constant 0 : index
    %1 = vector.load %arg2[%c0_1, %c0_2] : memref<8x1xi32, #tpu.memory_space<vmem>>, vector<8x1xi32>
    %cst = arith.constant dense<0xFF800000> : vector<8xf32>
    %2 = vector.multi_reduction <maximumf>, %0, %cst [1] : vector<8x32xf32> to vector<8xf32>
    %3 = vector.shape_cast %2 : vector<8xf32> to vector<8x1xf32>
    %4 = vector.broadcast %3 : vector<8x1xf32> to vector<8x32xf32>
    %5 = arith.cmpf oeq, %0, %4 : vector<8x32xf32>
    %6 = tpu.iota {dimensions = array<i32: 1>} : vector<8x32xi32>
    %7 = vector.broadcast %3 : vector<8x1xf32> to vector<8x32xf32>
    %8 = arith.subf %0, %7 : vector<8x32xf32>
    %9 = math.exp %8 : vector<8x32xf32>
    %cst_3 = arith.constant dense<0.000000e+00> : vector<8xf32>
    %10 = vector.multi_reduction <add>, %9, %cst_3 [1] : vector<8x32xf32> to vector<8xf32>
    %11 = vector.shape_cast %10 : vector<8xf32> to vector<8x1xf32>
    %12 = math.log %11 : vector<8x1xf32>
    %13 = vector.broadcast %1 : vector<8x1xi32> to vector<8x32xi32>
    %14 = arith.cmpi eq, %6, %13 : vector<8x32xi32>
    %cst_4 = arith.constant 0.000000e+00 : f32
    %15 = vector.broadcast %cst_4 : f32 to vector<8x32xf32>
    %16 = arith.select %14, %8, %15 : vector<8x32xi1>, vector<8x32xf32>
    %cst_5 = arith.constant dense<0.000000e+00> : vector<8xf32>
    %17 = vector.multi_reduction <add>, %16, %cst_5 [1] : vector<8x32xf32> to vector<8xf32>
    %18 = vector.shape_cast %17 : vector<8xf32> to vector<8x1xf32>
    %19 = arith.subf %12, %18 : vector<8x1xf32>
    %c32_i32 = arith.constant 32 : i32
    %20 = vector.broadcast %c32_i32 : i32 to vector<8x32xi32>
    %21 = arith.select %5, %6, %20 : vector<8x32xi1>, vector<8x32xi32>
    %cst_6 = arith.constant dense<2147483647> : vector<8xi32>
    %22 = vector.multi_reduction <minsi>, %21, %cst_6 [1] : vector<8x32xi32> to vector<8xi32>
    %23 = vector.shape_cast %22 : vector<8xi32> to vector<8x1xi32>
    %c0_7 = arith.constant 0 : index
    %c0_8 = arith.constant 0 : index
    %24 = vector.load %arg3[%c0_7, %c0_8] : memref<8x1xi32, #tpu.memory_space<vmem>>, vector<8x1xi32>
    tpu.vector_store %arg3[%c0_7, %c0_8], %23 {strides = array<i32>} : memref<8x1xi32, #tpu.memory_space<vmem>>, vector<8x1xi32>,
    %25 = arith.cmpi eq, %23, %1 : vector<8x1xi32>
    %26 = arith.extui %25 : vector<8x1xi1> to vector<8x1xi32>
    %27 = arith.sitofp %26 : vector<8x1xi32> to vector<8x1xf32>
    %28 = vector.shape_cast %19 : vector<8x1xf32> to vector<1x8x1xf32>
    %cst_9 = arith.constant dense<0.000000e+00> : vector<1xf32>
    %29 = vector.multi_reduction <add>, %28, %cst_9 [1, 2] : vector<1x8x1xf32> to vector<1xf32>
    %30 = vector.shape_cast %29 : vector<1xf32> to vector<1x1x1xf32>
    %31 = vector.extract %30[0, 0, 0] : f32 from vector<1x1x1xf32>
    %32 = vector.shape_cast %27 : vector<8x1xf32> to vector<1x8x1xf32>
    %cst_10 = arith.constant dense<0.000000e+00> : vector<1xf32>
    %33 = vector.multi_reduction <add>, %32, %cst_10 [1, 2] : vector<1x8x1xf32> to vector<1xf32>
    %34 = vector.shape_cast %33 : vector<1xf32> to vector<1x1x1xf32>
    %35 = vector.extract %34[0, 0, 0] : f32 from vector<1x1x1xf32>
    %36 = tpu.iota {dimensions = array<i32: 0>} : vector<8x128xi32>
    %37 = tpu.iota {dimensions = array<i32: 1>} : vector<8x128xi32>
    %c0_i32 = arith.constant 0 : i32
    %38 = vector.broadcast %c0_i32 : i32 to vector<8x128xi32>
    %39 = arith.cmpi eq, %36, %38 : vector<8x128xi32>
    %c0_i32_11 = arith.constant 0 : i32
    %40 = vector.broadcast %c0_i32_11 : i32 to vector<8x128xi32>
    %41 = arith.cmpi eq, %37, %40 : vector<8x128xi32>
    %42 = arith.andi %39, %41 : vector<8x128xi1>
    %c0_i32_12 = arith.constant 0 : i32
    %43 = vector.broadcast %c0_i32_12 : i32 to vector<8x128xi32>
    %44 = arith.cmpi eq, %36, %43 : vector<8x128xi32>
    %c1_i32 = arith.constant 1 : i32
    %45 = vector.broadcast %c1_i32 : i32 to vector<8x128xi32>
    %46 = arith.cmpi eq, %37, %45 : vector<8x128xi32>
    %47 = arith.andi %44, %46 : vector<8x128xi1>
    %cst_13 = arith.constant 0.000000e+00 : f32
    %48 = vector.broadcast %35 : f32 to vector<8x128xf32>
    %49 = vector.broadcast %cst_13 : f32 to vector<8x128xf32>
    %50 = arith.select %47, %48, %49 : vector<8x128xi1>, vector<8x128xf32>
    %51 = vector.broadcast %31 : f32 to vector<8x128xf32>
    %52 = arith.select %42, %51, %50 : vector<8x128xi1>, vector<8x128xf32>
    %c0_14 = arith.constant 0 : index
    %c0_15 = arith.constant 0 : index
    %c0_16 = arith.constant 0 : index
    %53 = vector.load %arg4[%c0_14, %c0_15, %c0_16] : memref<1x8x128xf32, #tpu.memory_space<vmem>>, vector<1x8x128xf32>
    %54 = vector.shape_cast %53 : vector<1x8x128xf32> to vector<8x128xf32>
    %55 = vector.shape_cast %52 : vector<8x128xf32> to vector<1x8x128xf32>
    tpu.vector_store %arg4[%c0_14, %c0_15, %c0_16], %55 {strides = array<i32>} : memref<1x8x128xf32, #tpu.memory_space<vmem>>, vector<1x8x128xf32>,
    return
  }
  func.func @transform_0(%arg0: i32) -> (i32, i32) {
    %c0_i32 = arith.constant 0 : i32
    %c0_i32_0 = arith.constant 0 : i32
    return %arg0, %c0_i32 : i32, i32
  }
  func.func @transform_1(%arg0: i32) -> (i32, i32) {
    %c0_i32 = arith.constant 0 : i32
    %c0_i32_0 = arith.constant 0 : i32
    return %arg0, %c0_i32 : i32, i32
  }
  func.func @transform_2(%arg0: i32) -> (i32, i32) {
    %c0_i32 = arith.constant 0 : i32
    %c0_i32_0 = arith.constant 0 : i32
    return %arg0, %c0_i32 : i32, i32
  }
  func.func @transform_3(%arg0: i32) -> (i32, i32, i32) {
    %c0_i32 = arith.constant 0 : i32
    %c0_i32_0 = arith.constant 0 : i32
    %c0_i32_1 = arith.constant 0 : i32
    return %arg0, %c0_i32, %c0_i32_0 : i32, i32, i32
  }
}

</mosaic_0001>

<llo_original>
// kernel: tpu_custom_call.1
$region0: #{tpu_custom_call.1}
  #allocation0 [shape = 'u32[]', space=smem, size = 0x4, offset = 0x4, fixed_abs, tag = 'smem constant byte address 0x4 - core index']
  #allocation1 [shape = 'u32[144,128]{1,0:T(1,128)}', space=vmem, size = 0x12000, scoped, tag = 'internal scratch']
  %s0 = inlined_call_operand.vmem [shape: f32[8,32], index: 0, kind: input, shape index: {}]
  %s1 = inlined_call_operand.vmem [shape: s32[8,1], index: 1, kind: input, shape index: {}]
  %s2 = inlined_call_operand.vmem [shape: s32[8,1], index: 2, kind: output, shape index: {0}]
  %s3 = inlined_call_operand.hbm [shape: f32[1,8,128], index: 3, kind: output, shape index: {1}]
  %4 = xla_tuple %s2, %s3
  %s5 = sld [smem:[#allocation0]]
  $region26: #{tpu_custom_call.1} parent=0
    _
  %s7 = ssub.s32 1, %s5
  %s8 = scalar_select 0, %s7, %s5
  $region1: #{tpu_custom_call.1} parent=0
    #allocation2 [shape = 'u8[4096]{0}', space=vmem, size = 0x1000, scoped, tag = 'output window, operand 1, single buffered']
    #allocation3 [shape = 's32[1]{0}', space=sflag, size = 0x4, scoped, tag = 'scoped memory for tpu_custom_call.1']
    %9 = vsyncpa [#allocation3], 0
    // Predicated region
    $region2: #{tpu_custom_call.1} parent=1 // pred_check
      _
    $region3: #{tpu_custom_call.1} parent=1 // pred_check_branch
      %11 = sbr.rel (0) target = $region5
    $region4: #{tpu_custom_call.1} parent=1 // pred_region
      _
    $region5: #{tpu_custom_call.1} parent=1 // pred_fallthru
      _
    // Predicated region
    $region6: #{tpu_custom_call.1} parent=1 // pred_check
      _
    $region7: #{tpu_custom_call.1} parent=1 // pred_check_branch
      %13 = sbr.rel (0) target = $region9
    $region8: #{tpu_custom_call.1} parent=1 // pred_region
      _
    $region9: #{tpu_custom_call.1} parent=1 // pred_fallthru
      _
    %v14 = vld [vmem:[%s0] sm:$0xff]
    %v15 = vld [vmem:[%s1] sm:$0xff]
    %vm16 = vcmask 261120
    %v17 = vsel %vm16, %v14, -inf
    %18 = vmax.xlane.f32.xlu0 %v17
    %v19 = vpop.xlane.xlu0 %18
    %vm20 = vcmp.eq.f32.partialorder %v14, %v19
    %v21 = vlaneseq
    %v22 = vand.u32 %v21, 127
    %v23 = vsub.f32 %v14, %v19
    %v24 = vmul.f32 %v23, 1.442695
    %v25 = vpow.pop %v24
    %v26 = vsel %vm16, %v25, 0.0
    %27 = vadd.xlane.f32.xlu0 %v26
    %v28 = vpop.xlane.xlu0 %27
    %v29 = vlog2.pop %v28
    %v30 = vmul.f32 %v29, 0.6931472
    %31 = vset.pattern.permute.xlu0 0
    %32 = vperm.xlu0 %31, %v15
    %v33 = vpop.permute.xlu0 %32
    %vm34 = vcmp.eq.s32.totalorder %v22, %v33
    %v35 = vsel %vm34, %v23, 0.0
    %v36 = vsel %vm16, %v35, 0.0
    %37 = vadd.xlane.f32.xlu0 %v36
    %v38 = vpop.xlane.xlu0 %37
    %v39 = vsub.f32 %v30, %v38
    %v40 = vsel %vm20, %v22, 32
    %v41 = vsel %vm16, %v40, 2147483647
    %v42 = vand.u32 %v41, 65535
    %v43 = vshra.s32 %v41, 16
    %v44 = vcvt.s32.f32 %v42
    %v45 = vcvt.s32.f32 %v43
    %46 = vmin.xlane.f32.xlu0 %v45
    %v47 = vpop.xlane.xlu0 %46
    %vm48 = vcmp.eq.f32.partialorder %v45, %v47
    %v49 = vsel %vm48, %v44, inf
    %50 = vmin.xlane.f32.xlu0 %v49
    %v51 = vpop.xlane.xlu0 %50
    %v52 = vcvt.f32.s32 %v51
    %v53 = vcvt.f32.s32 %v47
    %v54 = vshll.u32 %v53, 16
    %v55 = vadd.s32 %v54, %v52
    %vm56 = vcmask 7168
    %57 = vst.msk [vmem:[%s2] sm:$0xff] %vm56, %v55
    %vm58 = vcmp.eq.s32.totalorder %v55, %v15
    %v59 = vsel %vm58, 1, 0
    %v60 = vcvt.s32.f32 %v59
    %v61 = vsel %vm56, %v39, 0.0
    %62 = vadd.xlane.f32.xlu0 %v61
    %v63 = vpop.xlane.xlu0 %62
    %v64 = vrot.slane %v63, 4
    %v65 = vadd.f32 %v63, %v64
    %v66 = vrot.slane %v65, 2
    %v67 = vadd.f32 %v65, %v66
    %v68 = vrot.slane %v67, 1
    %v69 = vadd.f32 %v67, %v68
    %s70 = vtos %v69
    %v71 = vsel %vm56, %v60, 0.0
    %72 = vadd.xlane.f32.xlu0 %v71
    %v73 = vpop.xlane.xlu0 %72
    %v74 = vrot.slane %v73, 4
    %v75 = vadd.f32 %v73, %v74
    %v76 = vrot.slane %v75, 2
    %v77 = vadd.f32 %v75, %v76
    %v78 = vrot.slane %v77, 1
    %v79 = vadd.f32 %v77, %v78
    %s80 = vtos %v79
    %v81 = vlaneseq
    %v82 = vshrl.u32 %v81, 7
    %vm83 = vcmp.eq.s32.totalorder %v82, 0
    %vm84 = vcmp.eq.s32.totalorder %v22, 0
    %vm85 = vmand %vm83, %vm84
    %vm86 = vcmp.eq.s32.totalorder %v22, 1
    %vm87 = vmand %vm83, %vm86
    %v88 = vstv %s80
    %v89 = vsel %vm87, %v88, 0.0
    %v90 = vstv %s70
    %v91 = vsel %vm85, %v90, %v89
    %92 = vst [vmem:[#allocation2] sm:$0xff] %v91
    // Predicated region
    $region10: #{tpu_custom_call.1} parent=1 // pred_check
      _
    $region11: #{tpu_custom_call.1} parent=1 // pred_check_branch
      %94 = sbr.rel (0) target = $region13
    $region12: #{tpu_custom_call.1} parent=1 // pred_region
      _
    $region13: #{tpu_custom_call.1} parent=1 // pred_fallthru
      _
    // Predicated region
    $region14: #{tpu_custom_call.1} parent=1 // pred_check
      _
    $region15: #{tpu_custom_call.1} parent=1 // pred_check_branch
      %96 = sbr.rel (0) target = $region17
    $region16: #{tpu_custom_call.1} parent=1 // pred_region
      %s98 = ssub.s32 128, 128
      %99 = vsyncadd [#allocation3], %s98
      %s101 = sshll.u32 [#allocation2], 4
      %s102 = int_to_ptr.vmem [resolvable:$true] %s101
      %104 = dma.vmem_to_hbm [thread:$0]  %s102, 128, %s3, [#allocation3]
    $region17: #{tpu_custom_call.1} parent=1 // pred_fallthru
      _
    // Predicated region
    $region18: #{tpu_custom_call.1} parent=1 // pred_check
      _
    $region19: #{tpu_custom_call.1} parent=1 // pred_check_branch
      %106 = sbr.rel (0) target = $region21
    $region20: #{tpu_custom_call.1} parent=1 // pred_region
      _
    $region21: #{tpu_custom_call.1} parent=1 // pred_fallthru
      _
    // Predicated region
    $region22: #{tpu_custom_call.1} parent=1 // pred_check
      _
    $region23: #{tpu_custom_call.1} parent=1 // pred_check_branch
      %108 = sbr.rel (0) target = $region25
    $region24: #{tpu_custom_call.1} parent=1 // pred_region
      %109 = dma.done [#allocation3], 128
    $region25: #{tpu_custom_call.1} parent=1 // pred_fallthru
      _
    %110 = vsyncpa [#allocation3], 1

</llo_original>
